<compile_context>
chip_gen: v7x
topology: tpu7x:2x2x1
jax: 0.10.0
libtpu: 0.0.40
codegen_flags: <defaults>
</compile_context>

<pallas_src>
import functools
import math

import jax
import jax.numpy as jnp
from jax.experimental import pallas as pl
from jax.experimental.pallas import tpu as pltpu

_EPS = 1e-12  # torch.nn.functional.normalize default eps
# Clamp applied to the squared norm: eps^2 = 1e-24 is a *normal* float32, so
# rsqrt(max(sumsq, eps^2)) == 1 / max(norm, eps) exactly in the degenerate case.
_EPS_SQ = _EPS * _EPS


# --------------------------------------------------------------------------
# Kernels
# --------------------------------------------------------------------------
def _x_prologue_kernel(x_ref, xn_ref, *, radius):
    """Per-row L2-normalize a batch tile of x, scale by radius, cast to MXU dtype.

    x_ref  : (TM, D) f32 input tile
    xn_ref : (TM, D) mxu-dtype output tile
    """
    x = x_ref[...].astype(jnp.float32)
    ssq = jnp.sum(x * x, axis=1, keepdims=True)              # (TM, 1)
    inv = jax.lax.rsqrt(jnp.maximum(ssq, _EPS_SQ)) * radius   # EUP rsqrt
    xn_ref[...] = (x * inv).astype(xn_ref.dtype)


def _nl_matmul_kernel(xn_ref, w_ref, o_ref, wn_ref):
    """Grid = (num_O_tiles, num_B_tiles); O outer/parallel, batch inner/arbitrary.

    xn_ref : (TM, D)  pre-normalized x tile (mxu dtype, auto-pipelined)
    w_ref  : (TN, D)  raw weight tile (f32, resident across batch tiles)
    o_ref  : (TM, TN) output tile
    wn_ref : (TN, D)  normalized weight (mxu-dtype VMEM scratch, persists)
    """
    batch_idx = pl.program_id(1)  # inner (fastest) grid axis

    # Normalize the weight tile only once per O tile; reuse for all batch tiles.
    @pl.when(batch_idx == 0)
    def _():
        w = w_ref[...].astype(jnp.float32)
        w_ssq = jnp.sum(w * w, axis=1, keepdims=True)          # (TN, 1)
        w_inv = jax.lax.rsqrt(jnp.maximum(w_ssq, _EPS_SQ))     # EUP rsqrt
        wn_ref[...] = (w * w_inv).astype(wn_ref.dtype)

    # (TM, D) . (TN, D) contracting on D -> (TM, TN); MXU, f32 accumulate.
    o_ref[...] = jax.lax.dot_general(
        xn_ref[...], wn_ref[...],
        dimension_numbers=(((1,), (1,)), ((), ())),
        preferred_element_type=jnp.float32,
    ).astype(o_ref.dtype)


# --------------------------------------------------------------------------
# Wrapper
# --------------------------------------------------------------------------
def _round_up(n, m):
    return ((n + m - 1) // m) * m


def _default_vmem_budget():
    """Per-generation VMEM budget: ~75% of physical, falling back to the most
    conservative figure (v7x: 64 MiB/TC) if the query is unavailable."""
    try:
        cap = int(pltpu.get_tpu_info().vmem_capacity_bytes)
    except Exception:
        cap = 64 << 20
    return (cap * 3) // 4


def _footprint(tm, tn, D, mxu_bytes, out_bytes, w_buffers):
    """Approximate per-step VMEM footprint of the matmul kernel."""
    x_bytes = 2 * tm * D * mxu_bytes          # double-buffered x_n tile
    w_bytes = w_buffers * tn * D * 4          # buffered raw-weight tiles (f32)
    wn_bytes = tn * D * mxu_bytes             # normalized-weight scratch
    o_bytes = 2 * tm * tn * out_bytes         # double-buffered output tile
    return x_bytes + w_bytes + wn_bytes + o_bytes


def normalized_linear(x, weight, radius, *, tm=512, tn=2048,
                      out_dtype=jnp.float32, mxu_dtype=jnp.bfloat16,
                      w_buffers=3, vmem_budget_bytes=None):
    """x: (B, D) f32, weight: (O, D) f32, radius: python float -> (B, O).

    out_dtype=jnp.bfloat16 halves logits writeback traffic if the downstream
    loss accepts it; mxu_dtype=jnp.float32 gives a pure-f32 parity path.
    """
    B, D = x.shape
    O, Dw = weight.shape
    assert D == Dw, (D, Dw)

    x = x.astype(jnp.float32)
    weight = weight.astype(jnp.float32)

    mxu_bytes = jnp.dtype(mxu_dtype).itemsize
    out_bytes = jnp.dtype(out_dtype).itemsize
    sub = 16 if mxu_bytes < 4 else 8  # sublane packing of the x_n tile

    if vmem_budget_bytes is None:
        vmem_budget_bytes = _default_vmem_budget()

    # ---- batch tile: right-size for small/odd batches instead of padding a
    # full tile of zero rows.
    if B < 2 * tm:
        tm = _round_up(B, sub)
    tm = max(sub, _round_up(tm, sub))

    # ---- out-feature tile: lane-dense multiple of 128.
    o_128 = _round_up(O, 128)
    tn = min(tn, o_128)
    tn = max(128, (tn // 128) * 128)
    # Keep >= 2 O tiles (so the "parallel" outer axis keeps both v7x
    # TensorCores busy) whenever the split adds no extra padding.
    if o_128 // tn < 2 and o_128 >= 256 and (o_128 // 2) % 128 == 0:
        tn = o_128 // 2

    # ---- shrink tiles until the per-step footprint fits the VMEM budget.
    while (_footprint(tm, tn, D, mxu_bytes, out_bytes, w_buffers)
           > vmem_budget_bytes and tn > 128):
        tn = max(128, _round_up(tn // 2, 128))
    while (_footprint(tm, tn, D, mxu_bytes, out_bytes, w_buffers)
           > vmem_budget_bytes and tm > sub):
        tm = max(sub, _round_up(tm // 2, sub))

    b_pad = _round_up(B, tm)
    o_pad = _round_up(O, tn)
    if b_pad != B:
        # Zero rows normalize to zero under the eps clamp -> padding harmless.
        x = jnp.pad(x, ((0, b_pad - B), (0, 0)))
    if o_pad != O:
        weight = jnp.pad(weight, ((0, o_pad - O), (0, 0)))

    footprint = _footprint(tm, tn, D, mxu_bytes, out_bytes, w_buffers)
    vmem_limit = int(min(vmem_budget_bytes,
                         max(32 << 20, footprint + footprint // 4)))

    # ---------------- Stage 1: normalize x once (f32 -> mxu dtype). ---------
    x_n = pl.pallas_call(
        functools.partial(_x_prologue_kernel, radius=float(radius)),
        out_shape=jax.ShapeDtypeStruct((b_pad, D), mxu_dtype),
        grid_spec=pltpu.PrefetchScalarGridSpec(
            num_scalar_prefetch=0,
            grid=(b_pad // tm,),
            in_specs=[pl.BlockSpec((tm, D), lambda i: (i, 0))],
            out_specs=pl.BlockSpec((tm, D), lambda i: (i, 0)),
        ),
        compiler_params=pltpu.CompilerParams(
            dimension_semantics=("parallel",),
            vmem_limit_bytes=vmem_limit,
        ),
    )(x)

    # ---------------- Stage 2: normalized-weight matmul. --------------------
    def build(wbuf):
        if wbuf == 2:
            w_spec = pl.BlockSpec((tn, D), lambda j, i: (j, 0))
        else:
            # Deeper weight pipeline so the next O tile's DMA starts early
            # even when there are few inner (batch) steps to hide it behind.
            w_spec = pl.BlockSpec((tn, D), lambda j, i: (j, 0),
                                  pipeline_mode=pl.Buffered(wbuf))
        return pl.pallas_call(
            _nl_matmul_kernel,
            out_shape=jax.ShapeDtypeStruct((b_pad, o_pad), out_dtype),
            grid_spec=pltpu.PrefetchScalarGridSpec(
                num_scalar_prefetch=0,
                grid=(o_pad // tn, b_pad // tm),  # O tiles outer, batch inner
                in_specs=[
                    # x_n tile varies with the inner (batch) axis only.
                    pl.BlockSpec((tm, D), lambda j, i: (i, 0)),
                    # weight tile depends only on the outer (O) axis -> stays
                    # resident across all batch tiles (no re-DMA).
                    w_spec,
                ],
                out_specs=pl.BlockSpec((tm, tn), lambda j, i: (i, j)),
                scratch_shapes=[pltpu.VMEM((tn, D), mxu_dtype)],
            ),
            compiler_params=pltpu.CompilerParams(
                # Outer O axis parallel (megacore sharding on v7x); inner batch
                # axis must stay "arbitrary" because the normalized-weight
                # scratch is initialized at batch_idx == 0 and reused.
                dimension_semantics=("parallel", "arbitrary"),
                vmem_limit_bytes=vmem_limit,
            ),
        )

    try:
        out = build(w_buffers)(x_n, weight)
    except Exception:
        if w_buffers == 2:
            raise
        # Fall back to plain double-buffering if deeper buffering is rejected.
        out = build(2)(x_n, weight)

    if b_pad != B or o_pad != O:
        out = out[:B, :O]
    return out


# --------------------------------------------------------------------------
# Reference + tests
# --------------------------------------------------------------------------
def reference(x, weight, radius):
    w_n = weight / jnp.maximum(
        jnp.linalg.norm(weight, axis=1, keepdims=True), _EPS)
    x_n = x / jnp.maximum(
        jnp.linalg.norm(x, axis=1, keepdims=True), _EPS) * radius
    return x_n @ w_n.T


if __name__ == "__main__":
    radius = 10.0
    key = jax.random.PRNGKey(0)
    k1, k2, k3, k4 = jax.random.split(key, 4)

    # ---- Test 1: module-sized small shapes (single-tile path). -------------
    batch, in_features, out_features = 8, 32, 16
    stdv = 1.0 / math.sqrt(in_features)   # mirrors reset_parameters()
    w1 = jax.random.uniform(k2, (out_features, in_features), dtype=jnp.float32,
                            minval=-stdv, maxval=stdv)
    x1 = jax.random.normal(k1, (batch, in_features), dtype=jnp.float32)

    out1 = jax.block_until_ready(normalized_linear(x1, w1, radius))
    ref1 = reference(x1, w1, radius)
    assert out1.shape == (batch, out_features), out1.shape
    # bf16 MXU operands (f32 accumulation) -> small tolerance vs f32 reference.
    assert jnp.allclose(out1, ref1, atol=5e-2, rtol=5e-2), (
        f"max abs err = {float(jnp.max(jnp.abs(out1 - ref1)))}")

    # ---- Test 2: multi-tile, non-multiple shapes (exercises the weight-
    # scratch reuse across batch tiles, padding/slicing and the parallel O
    # axis with several tiles). ----------------------------------------------
    B2, D2, O2 = 200, 96, 520
    stdv2 = 1.0 / math.sqrt(D2)
    w2 = jax.random.uniform(k4, (O2, D2), dtype=jnp.float32,
                            minval=-stdv2, maxval=stdv2)
    x2 = jax.random.normal(k3, (B2, D2), dtype=jnp.float32)

    out2 = jax.block_until_ready(
        normalized_linear(x2, w2, radius, tm=64, tn=128))
    ref2 = reference(x2, w2, radius)
    assert out2.shape == (B2, O2), out2.shape
    assert jnp.allclose(out2, ref2, atol=5e-2, rtol=5e-2), (
        f"max abs err = {float(jnp.max(jnp.abs(out2 - ref2)))}")

    print("KERNEL_OK")
</pallas_src>

<mosaic_0001>
module attributes {stable_mosaic.version = 11 : i64} {
  func.func @_x_prologue_kernel(%arg0: i32, %arg1: memref<16x32xf32, #tpu.memory_space<vmem>>, %arg2: memref<16x32xbf16, #tpu.memory_space<vmem>>) attributes {dimension_semantics = [#tpu.dimension_semantics<parallel>], iteration_bounds = array<i64: 1>, scalar_prefetch = 0 : i64, scratch_operands = 0 : i64, tpu.core_type = #tpu.core_type<tc>, window_params = [{transform_indices = @transform_0, window_bounds = array<i64: 16, 32>}, {transform_indices = @transform_1, window_bounds = array<i64: 16, 32>}]} {
    %c0 = arith.constant 0 : index
    %c0_0 = arith.constant 0 : index
    %0 = vector.load %arg1[%c0, %c0_0] : memref<16x32xf32, #tpu.memory_space<vmem>>, vector<16x32xf32>
    %1 = arith.mulf %0, %0 : vector<16x32xf32>
    %cst = arith.constant dense<0.000000e+00> : vector<16xf32>
    %2 = vector.multi_reduction <add>, %1, %cst [1] : vector<16x32xf32> to vector<16xf32>
    %3 = vector.shape_cast %2 : vector<16xf32> to vector<16x1xf32>
    %cst_1 = arith.constant 1.000000e-24 : f32
    %4 = vector.broadcast %cst_1 : f32 to vector<16x1xf32>
    %5 = arith.maximumf %3, %4 : vector<16x1xf32>
    %6 = math.rsqrt %5 : vector<16x1xf32>
    %cst_2 = arith.constant 1.000000e+01 : f32
    %7 = vector.broadcast %cst_2 : f32 to vector<16x1xf32>
    %8 = arith.mulf %6, %7 : vector<16x1xf32>
    %9 = vector.broadcast %8 : vector<16x1xf32> to vector<16x32xf32>
    %10 = arith.mulf %0, %9 : vector<16x32xf32>
    %11 = arith.truncf %10 : vector<16x32xf32> to vector<16x32xbf16>
    %c0_3 = arith.constant 0 : index
    %c0_4 = arith.constant 0 : index
    %12 = vector.load %arg2[%c0_3, %c0_4] : memref<16x32xbf16, #tpu.memory_space<vmem>>, vector<16x32xbf16>
    tpu.vector_store %arg2[%c0_3, %c0_4], %11 {strides = array<i32>} : memref<16x32xbf16, #tpu.memory_space<vmem>>, vector<16x32xbf16>,
    return
  }
  func.func @transform_0(%arg0: i32) -> (i32, i32) {
    %c0_i32 = arith.constant 0 : i32
    %c0_i32_0 = arith.constant 0 : i32
    return %arg0, %c0_i32 : i32, i32
  }
  func.func @transform_1(%arg0: i32) -> (i32, i32) {
    %c0_i32 = arith.constant 0 : i32
    %c0_i32_0 = arith.constant 0 : i32
    return %arg0, %c0_i32 : i32, i32
  }
}

</mosaic_0001>

<llo_original>
// kernel: tpu_custom_call.1
$region0: #{tpu_custom_call.1}
  #allocation0 [shape = 'u32[]', space=smem, size = 0x4, offset = 0x4, fixed_abs, tag = 'smem constant byte address 0x4 - core index']
  #allocation1 [shape = 'u32[144,128]{1,0:T(1,128)}', space=vmem, size = 0x12000, scoped, tag = 'internal scratch']
  %s0 = inlined_call_operand.hbm [shape: f32[16,32], index: 0, kind: input, shape index: {}]
  %s1 = inlined_call_operand.hbm [shape: bf16[16,32], index: 1, kind: output, shape index: {}]
  %s2 = sld [smem:[#allocation0]]
  $region18: #{tpu_custom_call.1} parent=0
    _
  %s4 = ssub.s32 1, %s2
  %s5 = scalar_select 0, %s4, %s2
  $region1: #{tpu_custom_call.1} parent=0
    #allocation2 [shape = 'u8[8192]{0}', space=vmem, size = 0x2000, scoped, tag = 'input window, operand 0, single buffered']
    #allocation3 [shape = 's32[1]{0}', space=sflag, size = 0x4, scoped, tag = 'scoped memory for tpu_custom_call.1']
    #allocation4 [shape = 's32[1]{0}', space=sflag, size = 0x4, scoped, tag = 'scoped memory for tpu_custom_call.1']
    #allocation5 [shape = 'u8[4096]{0}', space=vmem, size = 0x1000, scoped, tag = 'output window, operand 0, single buffered']
    %6 = vsyncpa [#allocation3], 0
    %7 = vsyncpa [#allocation4], 0
    // Predicated region
    $region2: #{tpu_custom_call.1} parent=1 // pred_check
      _
    $region3: #{tpu_custom_call.1} parent=1 // pred_check_branch
      %9 = sbr.rel (0) target = $region5
    $region4: #{tpu_custom_call.1} parent=1 // pred_region
      %s11 = ssub.s32 256, 256
      %12 = vsyncadd [#allocation3], %s11
      %s13 = sshll.u32 [#allocation2], 4
      %s14 = int_to_ptr.vmem [resolvable:$true] %s13
      %19 = dma.hbm_to_vmem [thread:$0]  %s0, 256, %s14, [#allocation3], 128, 128, 8
    $region5: #{tpu_custom_call.1} parent=1 // pred_fallthru
      _
    // Predicated region
    $region6: #{tpu_custom_call.1} parent=1 // pred_check
      _
    $region7: #{tpu_custom_call.1} parent=1 // pred_check_branch
      %21 = sbr.rel (0) target = $region9
    $region8: #{tpu_custom_call.1} parent=1 // pred_region
      %22 = dma.done [#allocation3], 256
    $region9: #{tpu_custom_call.1} parent=1 // pred_fallthru
      _
    %v23 = vld [vmem:[#allocation2] sm:$0xff]
    %v24 = vld [vmem:[#allocation2 + $0x8] sm:$0xff]
    %v25 = vmul.f32 %v23, %v23
    %v26 = vmul.f32 %v24, %v24
    %vm27 = vcmask 261120
    %v28 = vsel %vm27, %v25, 0.0
    %29 = vadd.xlane.f32.xlu0 %v28
    %v30 = vpop.xlane.xlu0 %29
    %v31 = vsel %vm27, %v26, 0.0
    %32 = vadd.xlane.f32.xlu0 %v31
    %v33 = vpop.xlane.xlu0 %32
    %v34 = vmax.f32 %v30, 1e-24
    %v35 = vmax.f32 %v33, 1e-24
    %v36 = vrsqrt.pop %v34
    %v37 = vrsqrt.pop %v35
    %v38 = vmul.f32 %v36, 10.0
    %v39 = vmul.f32 %v37, 10.0
    %v40 = vmul.f32 %v23, %v38
    %v41 = vmul.f32 %v24, %v39
    %v42 = vpack.c.bf16 %v41, %v40
    %v44 = vunpack.c.l.b16 %v42
    %v45 = vunpack.c.h.b16 %v42
    %v46 = vpack.c.b16 %v44, %v44
    %v47 = vpack.c.b16 %v45, %v45
    %vm50 = vcmask 257024
    %51 = vst.msk [vmem:[#allocation5] sm:$0xf] %vm50, %v46
    %52 = vst.msk [vmem:[#allocation5 + $0x4] sm:$0xf] %vm50, %v47
    // Predicated region
    $region10: #{tpu_custom_call.1} parent=1 // pred_check
      _
    $region11: #{tpu_custom_call.1} parent=1 // pred_check_branch
      %54 = sbr.rel (0) target = $region13
    $region12: #{tpu_custom_call.1} parent=1 // pred_region
      %s56 = ssub.s32 128, 128
      %57 = vsyncadd [#allocation4], %s56
      %s58 = sshll.u32 [#allocation5], 4
      %s59 = int_to_ptr.vmem [resolvable:$true] %s58
      %64 = dma.vmem_to_hbm [thread:$0]  %s59, 128, %s1, [#allocation4], 64, 64, 4
    $region13: #{tpu_custom_call.1} parent=1 // pred_fallthru
      _
    // Predicated region
    $region14: #{tpu_custom_call.1} parent=1 // pred_check
      _
    $region15: #{tpu_custom_call.1} parent=1 // pred_check_branch
      %66 = sbr.rel (0) target = $region17
    $region16: #{tpu_custom_call.1} parent=1 // pred_region
      %67 = dma.done [#allocation4], 128
    $region17: #{tpu_custom_call.1} parent=1 // pred_fallthru
      _
    %68 = vsyncpa [#allocation3], 1
    %69 = vsyncpa [#allocation4], 1

</llo_original>
